<compile_context>
chip_gen: v7x
topology: tpu7x:2x2x1
jax: 0.10.0
libtpu: 0.0.40
codegen_flags: <defaults>
</compile_context>

<pallas_src>
import functools

import jax
import jax.numpy as jnp
from jax.experimental import pallas as pl
from jax.experimental.pallas import tpu as pltpu


def _round_up(n: int, m: int) -> int:
    return ((n + m - 1) // m) * m


# ----------------------------------------------------------------------------
# Fused Pallas kernel
# ----------------------------------------------------------------------------
def _vae_fused_kernel(x_ref, eps_ref, w_ref, b_ref, out_ref, *,
                      n_enc, n_dec, latent_dim, state_dim):
    """Fused VAE forward.

    VMEM refs:
      x_ref   : (B, state_dim)
      eps_ref : (B, latent_dim)
      w_ref   : (L, max_in, max_out)  zero-padded weights, layer order
                [enc_0..enc_{n_enc-1}, merged_head, dec_0..dec_{n_dec-1}]
      b_ref   : (L, 1, max_out)       zero-padded biases
      out_ref : (B, out_width)        lane-dense slab
                [ recon_x | means | log_var | z | zero padding ]
    """
    B = x_ref.shape[0]
    max_in = w_ref.shape[1]

    def linear(h, li):
        # Zero-pad activation lanes up to max_in (padded weight rows are zero,
        # so only layers whose true input width < max_in actually need it).
        cur = h.shape[1]
        if cur < max_in:
            h = jnp.concatenate(
                [h, jnp.zeros((B, max_in - cur), h.dtype)], axis=-1)
        return jnp.dot(h, w_ref[li], preferred_element_type=jnp.float32) + b_ref[li]

    li = 0

    # ---- Encoder MLP (ReLU on every layer) ----
    h = x_ref[...]
    for _ in range(n_enc):
        h = jnp.maximum(linear(h, li), 0.0)
        li += 1

    # ---- Merged means / log_var head (single MXU pass) ----
    mv = linear(h, li)                       # (B, max_out); real data in [:2*latent]
    li += 1
    means = mv[:, :latent_dim]
    log_var = mv[:, latent_dim:2 * latent_dim]

    # ---- Reparameterization: z = eps * exp(0.5*log_var) + means ----
    z = eps_ref[...] * jnp.exp(0.5 * log_var) + means

    # ---- Decoder MLP (ReLU ... ReLU, Sigmoid on last layer) ----
    d = z
    for i in range(n_dec):
        y = linear(d, li)
        li += 1
        if i == n_dec - 1:
            # sigmoid: exp on EUP + approx vrcp (EUP slot, otherwise idle).
            # Clip absorbs the ~1 ulp approximation overshoot so recon_x
            # stays in [0, 1] like a true sigmoid.
            d = jnp.clip(pl.reciprocal(1.0 + jnp.exp(-y), approx=True), 0.0, 1.0)
        else:
            d = jnp.maximum(y, 0.0)
    recon_x = d[:, :state_dim]

    # ---- Single lane-dense store into the (B, >=128) output slab ----
    pad = out_ref.shape[1] - (state_dim + 3 * latent_dim)
    parts = [recon_x, means, log_var, z]
    if pad > 0:
        parts.append(jnp.zeros((B, pad), jnp.float32))
    out_ref[...] = jnp.concatenate(parts, axis=-1)


# ----------------------------------------------------------------------------
# JAX wrapper (grid-less pallas_call, whole-array VMEM refs)
# ----------------------------------------------------------------------------
def vae_forward(w_stack, b_stack, x, eps, *, n_enc, n_dec):
    """Returns (recon_x, means, log_var, z), matching the PyTorch module."""
    B, state_dim = x.shape
    latent_dim = eps.shape[1]

    total = state_dim + 3 * latent_dim
    out_width = max(128, _round_up(total, 128))   # lane-dense output slab

    kernel = functools.partial(
        _vae_fused_kernel,
        n_enc=n_enc,
        n_dec=n_dec,
        latent_dim=latent_dim,
        state_dim=state_dim,
    )

    vmem = lambda: pl.BlockSpec(memory_space=pltpu.MemorySpace.VMEM)

    slab = pl.pallas_call(
        kernel,
        out_shape=jax.ShapeDtypeStruct((B, out_width), jnp.float32),
        in_specs=[vmem(), vmem(), vmem(), vmem()],
        out_specs=vmem(),
    )(x, eps, w_stack, b_stack)

    recon_x = slab[:, :state_dim]
    means = slab[:, state_dim:state_dim + latent_dim]
    log_var = slab[:, state_dim + latent_dim:state_dim + 2 * latent_dim]
    z = slab[:, state_dim + 2 * latent_dim:total]
    return recon_x, means, log_var, z


# ----------------------------------------------------------------------------
# Pure-JAX reference (for correctness check), uses the unpadded layer list
# ----------------------------------------------------------------------------
def vae_forward_ref(layers, x, eps, *, n_enc, n_dec):
    h = x
    for i in range(n_enc):
        w, b = layers[i]
        h = jnp.maximum(h @ w + b, 0.0)
    w, b = layers[n_enc]
    mv = h @ w + b
    L = eps.shape[1]
    means, log_var = mv[:, :L], mv[:, L:]
    z = eps * jnp.exp(0.5 * log_var) + means
    d = z
    for i in range(n_dec):
        w, b = layers[n_enc + 1 + i]
        y = d @ w + b
        d = 1.0 / (1.0 + jnp.exp(-y)) if i == n_dec - 1 else jnp.maximum(y, 0.0)
    return d, means, log_var, z


# ----------------------------------------------------------------------------
# Parameter construction (PyTorch nn.Linear init, transposed + packed)
# ----------------------------------------------------------------------------
def _init_linear(key, in_dim, out_dim):
    """Returns (w, b): w (in_dim, out_dim) = PyTorch W.T, b (out_dim,)."""
    kw, kb = jax.random.split(key)
    bound = 1.0 / (in_dim ** 0.5)
    w_pt = jax.random.uniform(kw, (out_dim, in_dim), jnp.float32, -bound, bound)
    b = jax.random.uniform(kb, (out_dim,), jnp.float32, -bound, bound)
    return w_pt.T, b


def init_vae_params(key, state_dim, latent_dim, enc_hidden, dec_hidden):
    """Builds per-layer (w, b) list plus packed (w_stack, b_stack) tensors."""
    keys = jax.random.split(key, 16)
    k = 0
    layers = []

    # Encoder MLP: [state_dim] + enc_hidden, all ReLU
    enc_dims = [state_dim] + list(enc_hidden)
    for i in range(len(enc_dims) - 1):
        layers.append(_init_linear(keys[k], enc_dims[i], enc_dims[i + 1]))
        k += 1
    n_enc = len(enc_dims) - 1

    # Encoder heads (linear_means, linear_log_var) merged into one matmul.
    w_m, b_m = _init_linear(keys[k], enc_hidden[-1], latent_dim); k += 1
    w_v, b_v = _init_linear(keys[k], enc_hidden[-1], latent_dim); k += 1
    layers.append((jnp.concatenate([w_m, w_v], axis=1),
                   jnp.concatenate([b_m, b_v], axis=0)))

    # Decoder MLP: [latent_dim] + dec_hidden + [state_dim], ReLU... + Sigmoid
    dec_dims = [latent_dim] + list(dec_hidden) + [state_dim]
    for i in range(len(dec_dims) - 1):
        layers.append(_init_linear(keys[k], dec_dims[i], dec_dims[i + 1]))
        k += 1
    n_dec = len(dec_dims) - 1

    # ---- Pack once at init time: 2 parameter tensors instead of ~16 ----
    max_in = max(w.shape[0] for w, _ in layers)
    max_out = max(w.shape[1] for w, _ in layers)
    w_stack = jnp.stack([
        jnp.pad(w, ((0, max_in - w.shape[0]), (0, max_out - w.shape[1])))
        for w, _ in layers
    ])                                              # (L, max_in, max_out)
    b_stack = jnp.stack([
        jnp.pad(b, (0, max_out - b.shape[0])).reshape(1, max_out)
        for _, b in layers
    ])                                              # (L, 1, max_out)

    meta = {"n_enc": n_enc, "n_dec": n_dec}
    return layers, w_stack, b_stack, meta


# ----------------------------------------------------------------------------
# Main
# ----------------------------------------------------------------------------
if __name__ == "__main__":
    batch = 8
    state_dim = 32
    latent_dim = 8
    enc_hidden = [32, 32]
    dec_hidden = [32, 32]

    root = jax.random.PRNGKey(0)
    k_param, k_x, k_eps = jax.random.split(root, 3)

    layers, w_stack, b_stack, meta = init_vae_params(
        k_param, state_dim, latent_dim, enc_hidden, dec_hidden)

    # Input x in [0,1] (VAE with BCE loss implies data in [0,1]).
    x = jax.random.uniform(k_x, (batch, state_dim), jnp.float32)
    # eps ~ N(0,1): the PyTorch module samples it with torch.randn inside
    # forward; we generate it deterministically outside the kernel instead.
    eps = jax.random.normal(k_eps, (batch, latent_dim), jnp.float32)

    fwd = jax.jit(functools.partial(vae_forward,
                                    n_enc=meta["n_enc"], n_dec=meta["n_dec"]))
    recon_x, means, log_var, z = jax.block_until_ready(
        fwd(w_stack, b_stack, x, eps))

    # Shape / range checks
    assert recon_x.shape == (batch, state_dim)
    assert means.shape == (batch, latent_dim)
    assert log_var.shape == (batch, latent_dim)
    assert z.shape == (batch, latent_dim)
    assert bool(jnp.all(recon_x >= 0.0)) and bool(jnp.all(recon_x <= 1.0))
    assert bool(jnp.all(jnp.isfinite(recon_x)))

    # Numerical check against pure-JAX reference
    ref = jax.jit(functools.partial(vae_forward_ref,
                                    n_enc=meta["n_enc"], n_dec=meta["n_dec"]))
    r_ref, m_ref, lv_ref, z_ref = ref(layers, x, eps)
    # recon_x uses the approximate (EUP) reciprocal -> slightly looser tol.
    assert bool(jnp.allclose(recon_x, r_ref, rtol=2e-3, atol=2e-3))
    assert bool(jnp.allclose(means, m_ref, rtol=1e-4, atol=1e-4))
    assert bool(jnp.allclose(log_var, lv_ref, rtol=1e-4, atol=1e-4))
    assert bool(jnp.allclose(z, z_ref, rtol=1e-4, atol=1e-4))

    print("KERNEL_OK")
</pallas_src>

<mosaic_0001>
module attributes {stable_mosaic.version = 11 : i64} {
  func.func @_vae_fused_kernel(%arg0: memref<8x32xf32, #tpu.memory_space<vmem>>, %arg1: memref<8x8xf32, #tpu.memory_space<vmem>>, %arg2: memref<6x32x32xf32, #tpu.memory_space<vmem>>, %arg3: memref<6x1x32xf32, #tpu.memory_space<vmem>>, %arg4: memref<8x128xf32, #tpu.memory_space<vmem>>) attributes {dimension_semantics = [], scalar_prefetch = 0 : i64, scratch_operands = 0 : i64, tpu.core_type = #tpu.core_type<tc>} {
    %c0 = arith.constant 0 : index
    %c0_0 = arith.constant 0 : index
    %0 = vector.load %arg0[%c0, %c0_0] : memref<8x32xf32, #tpu.memory_space<vmem>>, vector<8x32xf32>
    %c0_1 = arith.constant 0 : index
    %c0_2 = arith.constant 0 : index
    %c0_3 = arith.constant 0 : index
    %1 = vector.load %arg2[%c0_1, %c0_2, %c0_3] : memref<6x32x32xf32, #tpu.memory_space<vmem>>, vector<1x32x32xf32>
    %2 = vector.shape_cast %1 : vector<1x32x32xf32> to vector<32x32xf32>
    %cst = arith.constant dense<0.000000e+00> : vector<8x32xf32>
    %3 = tpu.matmul %0, %2, %cst {dimension_numbers = #tpu.dot_dimension_numbers<[1], [0], [0], [1], [0, 0, 1, 1], [], []>} : vector<8x32xf32>, vector<32x32xf32>, vector<8x32xf32> -> vector<8x32xf32>
    %c0_4 = arith.constant 0 : index
    %c0_5 = arith.constant 0 : index
    %c0_6 = arith.constant 0 : index
    %4 = vector.load %arg3[%c0_4, %c0_5, %c0_6] : memref<6x1x32xf32, #tpu.memory_space<vmem>>, vector<1x1x32xf32>
    %5 = vector.shape_cast %4 : vector<1x1x32xf32> to vector<1x32xf32>
    %6 = vector.broadcast %5 : vector<1x32xf32> to vector<8x32xf32>
    %7 = arith.addf %3, %6 : vector<8x32xf32>
    %cst_7 = arith.constant 0.000000e+00 : f32
    %8 = vector.broadcast %cst_7 : f32 to vector<8x32xf32>
    %9 = arith.maximumf %7, %8 : vector<8x32xf32>
    %c1 = arith.constant 1 : index
    %c0_8 = arith.constant 0 : index
    %c0_9 = arith.constant 0 : index
    %10 = vector.load %arg2[%c1, %c0_8, %c0_9] : memref<6x32x32xf32, #tpu.memory_space<vmem>>, vector<1x32x32xf32>
    %11 = vector.shape_cast %10 : vector<1x32x32xf32> to vector<32x32xf32>
    %cst_10 = arith.constant dense<0.000000e+00> : vector<8x32xf32>
    %12 = tpu.matmul %9, %11, %cst_10 {dimension_numbers = #tpu.dot_dimension_numbers<[1], [0], [0], [1], [0, 0, 1, 1], [], []>} : vector<8x32xf32>, vector<32x32xf32>, vector<8x32xf32> -> vector<8x32xf32>
    %c1_11 = arith.constant 1 : index
    %c0_12 = arith.constant 0 : index
    %c0_13 = arith.constant 0 : index
    %13 = vector.load %arg3[%c1_11, %c0_12, %c0_13] : memref<6x1x32xf32, #tpu.memory_space<vmem>>, vector<1x1x32xf32>
    %14 = vector.shape_cast %13 : vector<1x1x32xf32> to vector<1x32xf32>
    %15 = vector.broadcast %14 : vector<1x32xf32> to vector<8x32xf32>
    %16 = arith.addf %12, %15 : vector<8x32xf32>
    %cst_14 = arith.constant 0.000000e+00 : f32
    %17 = vector.broadcast %cst_14 : f32 to vector<8x32xf32>
    %18 = arith.maximumf %16, %17 : vector<8x32xf32>
    %c2 = arith.constant 2 : index
    %c0_15 = arith.constant 0 : index
    %c0_16 = arith.constant 0 : index
    %19 = vector.load %arg2[%c2, %c0_15, %c0_16] : memref<6x32x32xf32, #tpu.memory_space<vmem>>, vector<1x32x32xf32>
    %20 = vector.shape_cast %19 : vector<1x32x32xf32> to vector<32x32xf32>
    %cst_17 = arith.constant dense<0.000000e+00> : vector<8x32xf32>
    %21 = tpu.matmul %18, %20, %cst_17 {dimension_numbers = #tpu.dot_dimension_numbers<[1], [0], [0], [1], [0, 0, 1, 1], [], []>} : vector<8x32xf32>, vector<32x32xf32>, vector<8x32xf32> -> vector<8x32xf32>
    %c2_18 = arith.constant 2 : index
    %c0_19 = arith.constant 0 : index
    %c0_20 = arith.constant 0 : index
    %22 = vector.load %arg3[%c2_18, %c0_19, %c0_20] : memref<6x1x32xf32, #tpu.memory_space<vmem>>, vector<1x1x32xf32>
    %23 = vector.shape_cast %22 : vector<1x1x32xf32> to vector<1x32xf32>
    %24 = vector.broadcast %23 : vector<1x32xf32> to vector<8x32xf32>
    %25 = arith.addf %21, %24 : vector<8x32xf32>
    %26 = vector.extract_strided_slice %25 {offsets = [0, 0], sizes = [8, 8], strides = [1, 1]} : vector<8x32xf32> to vector<8x8xf32>
    %27 = vector.extract_strided_slice %25 {offsets = [0, 8], sizes = [8, 8], strides = [1, 1]} : vector<8x32xf32> to vector<8x8xf32>
    %c0_21 = arith.constant 0 : index
    %c0_22 = arith.constant 0 : index
    %28 = vector.load %arg1[%c0_21, %c0_22] : memref<8x8xf32, #tpu.memory_space<vmem>>, vector<8x8xf32>
    %cst_23 = arith.constant 5.000000e-01 : f32
    %29 = vector.broadcast %cst_23 : f32 to vector<8x8xf32>
    %30 = arith.mulf %29, %27 : vector<8x8xf32>
    %31 = math.exp %30 : vector<8x8xf32>
    %32 = arith.mulf %28, %31 : vector<8x8xf32>
    %33 = arith.addf %32, %26 : vector<8x8xf32>
    %cst_24 = arith.constant 0.000000e+00 : f32
    %34 = vector.broadcast %cst_24 : f32 to vector<8x24xf32>
    %35 = tpu.concatenate %33, %34 in 1 : vector<8x8xf32>, vector<8x24xf32> -> vector<8x32xf32>
    %c3 = arith.constant 3 : index
    %c0_25 = arith.constant 0 : index
    %c0_26 = arith.constant 0 : index
    %36 = vector.load %arg2[%c3, %c0_25, %c0_26] : memref<6x32x32xf32, #tpu.memory_space<vmem>>, vector<1x32x32xf32>
    %37 = vector.shape_cast %36 : vector<1x32x32xf32> to vector<32x32xf32>
    %cst_27 = arith.constant dense<0.000000e+00> : vector<8x32xf32>
    %38 = tpu.matmul %35, %37, %cst_27 {dimension_numbers = #tpu.dot_dimension_numbers<[1], [0], [0], [1], [0, 0, 1, 1], [], []>} : vector<8x32xf32>, vector<32x32xf32>, vector<8x32xf32> -> vector<8x32xf32>
    %c3_28 = arith.constant 3 : index
    %c0_29 = arith.constant 0 : index
    %c0_30 = arith.constant 0 : index
    %39 = vector.load %arg3[%c3_28, %c0_29, %c0_30] : memref<6x1x32xf32, #tpu.memory_space<vmem>>, vector<1x1x32xf32>
    %40 = vector.shape_cast %39 : vector<1x1x32xf32> to vector<1x32xf32>
    %41 = vector.broadcast %40 : vector<1x32xf32> to vector<8x32xf32>
    %42 = arith.addf %38, %41 : vector<8x32xf32>
    %cst_31 = arith.constant 0.000000e+00 : f32
    %43 = vector.broadcast %cst_31 : f32 to vector<8x32xf32>
    %44 = arith.maximumf %42, %43 : vector<8x32xf32>
    %c4 = arith.constant 4 : index
    %c0_32 = arith.constant 0 : index
    %c0_33 = arith.constant 0 : index
    %45 = vector.load %arg2[%c4, %c0_32, %c0_33] : memref<6x32x32xf32, #tpu.memory_space<vmem>>, vector<1x32x32xf32>
    %46 = vector.shape_cast %45 : vector<1x32x32xf32> to vector<32x32xf32>
    %cst_34 = arith.constant dense<0.000000e+00> : vector<8x32xf32>
    %47 = tpu.matmul %44, %46, %cst_34 {dimension_numbers = #tpu.dot_dimension_numbers<[1], [0], [0], [1], [0, 0, 1, 1], [], []>} : vector<8x32xf32>, vector<32x32xf32>, vector<8x32xf32> -> vector<8x32xf32>
    %c4_35 = arith.constant 4 : index
    %c0_36 = arith.constant 0 : index
    %c0_37 = arith.constant 0 : index
    %48 = vector.load %arg3[%c4_35, %c0_36, %c0_37] : memref<6x1x32xf32, #tpu.memory_space<vmem>>, vector<1x1x32xf32>
    %49 = vector.shape_cast %48 : vector<1x1x32xf32> to vector<1x32xf32>
    %50 = vector.broadcast %49 : vector<1x32xf32> to vector<8x32xf32>
    %51 = arith.addf %47, %50 : vector<8x32xf32>
    %cst_38 = arith.constant 0.000000e+00 : f32
    %52 = vector.broadcast %cst_38 : f32 to vector<8x32xf32>
    %53 = arith.maximumf %51, %52 : vector<8x32xf32>
    %c5 = arith.constant 5 : index
    %c0_39 = arith.constant 0 : index
    %c0_40 = arith.constant 0 : index
    %54 = vector.load %arg2[%c5, %c0_39, %c0_40] : memref<6x32x32xf32, #tpu.memory_space<vmem>>, vector<1x32x32xf32>
    %55 = vector.shape_cast %54 : vector<1x32x32xf32> to vector<32x32xf32>
    %cst_41 = arith.constant dense<0.000000e+00> : vector<8x32xf32>
    %56 = tpu.matmul %53, %55, %cst_41 {dimension_numbers = #tpu.dot_dimension_numbers<[1], [0], [0], [1], [0, 0, 1, 1], [], []>} : vector<8x32xf32>, vector<32x32xf32>, vector<8x32xf32> -> vector<8x32xf32>
    %c5_42 = arith.constant 5 : index
    %c0_43 = arith.constant 0 : index
    %c0_44 = arith.constant 0 : index
    %57 = vector.load %arg3[%c5_42, %c0_43, %c0_44] : memref<6x1x32xf32, #tpu.memory_space<vmem>>, vector<1x1x32xf32>
    %58 = vector.shape_cast %57 : vector<1x1x32xf32> to vector<1x32xf32>
    %59 = vector.broadcast %58 : vector<1x32xf32> to vector<8x32xf32>
    %60 = arith.addf %56, %59 : vector<8x32xf32>
    %cst_45 = arith.constant 0.000000e+00 : f32
    %61 = vector.broadcast %cst_45 : f32 to vector<8x32xf32>
    %62 = arith.subf %61, %60 : vector<8x32xf32>
    %63 = math.exp %62 : vector<8x32xf32>
    %cst_46 = arith.constant 1.000000e+00 : f32
    %64 = vector.broadcast %cst_46 : f32 to vector<8x32xf32>
    %65 = arith.addf %64, %63 : vector<8x32xf32>
    %66 = tpu.reciprocal %65 {approx = true} : vector<8x32xf32> -> vector<8x32xf32>
    %cst_47 = arith.constant 0.000000e+00 : f32
    %cst_48 = arith.constant 1.000000e+00 : f32
    %67 = vector.broadcast %cst_47 : f32 to vector<8x32xf32>
    %68 = arith.maximumf %67, %66 : vector<8x32xf32>
    %69 = vector.broadcast %cst_48 : f32 to vector<8x32xf32>
    %70 = arith.minimumf %69, %68 : vector<8x32xf32>
    %cst_49 = arith.constant 0.000000e+00 : f32
    %71 = vector.broadcast %cst_49 : f32 to vector<8x72xf32>
    %72 = tpu.concatenate %70, %26, %27, %33, %71 in 1 : vector<8x32xf32>, vector<8x8xf32>, vector<8x8xf32>, vector<8x8xf32>, vector<8x72xf32> -> vector<8x128xf32>
    %c0_50 = arith.constant 0 : index
    %c0_51 = arith.constant 0 : index
    %73 = vector.load %arg4[%c0_50, %c0_51] : memref<8x128xf32, #tpu.memory_space<vmem>>, vector<8x128xf32>
    tpu.vector_store %arg4[%c0_50, %c0_51], %72 {strides = array<i32>} : memref<8x128xf32, #tpu.memory_space<vmem>>, vector<8x128xf32>,
    return
  }
}

</mosaic_0001>

<llo_original>
// kernel: vae_forward.1
$region0: #{vae_forward.1}
  #allocation0 [shape = 'u32[]', space=smem, size = 0x4, offset = 0x4, fixed_abs, tag = 'smem constant byte address 0x4 - core index']
  #allocation1 [shape = 'u32[144,128]{1,0:T(1,128)}', space=vmem, size = 0x12000, scoped, tag = 'internal scratch']
  %s0 = inlined_call_operand.hbm [shape: f32[8,32], index: 0, kind: input, shape index: {}]
  %s1 = inlined_call_operand.vmem [shape: f32[8,8], index: 1, kind: input, shape index: {}]
  %s2 = inlined_call_operand.hbm [shape: f32[6,32,32], index: 2, kind: input, shape index: {}]
  %s3 = inlined_call_operand.hbm [shape: f32[6,1,32], index: 3, kind: input, shape index: {}]
  %s4 = inlined_call_operand.vmem [shape: f32[8,128], index: 4, kind: output, shape index: {}]
  %s5 = sld [smem:[#allocation0]]
  $region38: #{vae_forward.1} parent=0
    _
  %s7 = ssub.s32 1, %s5
  %s8 = scalar_select 0, %s7, %s5
  $region1: #{vae_forward.1} parent=0
    #allocation2 [shape = 'u8[4096]{0}', space=vmem, size = 0x1000, scoped, tag = 'input window, operand 0, single buffered']
    #allocation3 [shape = 's32[1]{0}', space=sflag, size = 0x4, scoped, tag = 'scoped memory for vae_forward.1']
    #allocation4 [shape = 'u8[98304]{0}', space=vmem, size = 0x18000, scoped, tag = 'input window, operand 2, single buffered']
    #allocation5 [shape = 's32[1]{0}', space=sflag, size = 0x4, scoped, tag = 'scoped memory for vae_forward.1']
    #allocation6 [shape = 'u8[3072]{0}', space=vmem, size = 0xc00, scoped, tag = 'input window, operand 3, single buffered']
    %9 = vsyncpa [#allocation3], 0
    %10 = vsyncpa [#allocation5], 0
    // Predicated region
    $region2: #{vae_forward.1} parent=1 // pred_check
      _
    $region3: #{vae_forward.1} parent=1 // pred_check_branch
      %12 = sbr.rel (0) target = $region5
    $region4: #{vae_forward.1} parent=1 // pred_region
      %s14 = ssub.s32 128, 128
      %15 = vsyncadd [#allocation3], %s14
      %s17 = sshll.u32 [#allocation2], 4
      %s18 = int_to_ptr.vmem [resolvable:$true] %s17
      %20 = dma.hbm_to_vmem [thread:$0]  %s0, 128, %s18, [#allocation3]
    $region5: #{vae_forward.1} parent=1 // pred_fallthru
      _
    // Predicated region
    $region6: #{vae_forward.1} parent=1 // pred_check
      _
    $region7: #{vae_forward.1} parent=1 // pred_check_branch
      %22 = sbr.rel (0) target = $region9
    $region8: #{vae_forward.1} parent=1 // pred_region
      _
    $region9: #{vae_forward.1} parent=1 // pred_fallthru
      _
    // Predicated region
    $region10: #{vae_forward.1} parent=1 // pred_check
      _
    $region11: #{vae_forward.1} parent=1 // pred_check_branch
      %24 = sbr.rel (0) target = $region13
    $region12: #{vae_forward.1} parent=1 // pred_region
      %s26 = ssub.s32 3072, 3072
      %27 = vsyncadd [#allocation5], %s26
      %s28 = sshll.u32 [#allocation4], 4
      %s29 = int_to_ptr.vmem [resolvable:$true] %s28
      %34 = dma.hbm_to_vmem [thread:$0]  %s2, 3072, %s29, [#allocation5], 128, 128, 8
    $region13: #{vae_forward.1} parent=1 // pred_fallthru
      _
    // Predicated region
    $region14: #{vae_forward.1} parent=1 // pred_check
      _
    $region15: #{vae_forward.1} parent=1 // pred_check_branch
      %36 = sbr.rel (0) target = $region17
    $region16: #{vae_forward.1} parent=1 // pred_region
      %s38 = ssub.s32 96, 96
      %39 = vsyncadd [#allocation5], %s38
      %s40 = sshll.u32 [#allocation6], 4
      %s41 = int_to_ptr.vmem [resolvable:$true] %s40
      %46 = dma.hbm_to_vmem [thread:$0]  %s3, 96, %s41, [#allocation5], 16, 16, 1
    $region17: #{vae_forward.1} parent=1 // pred_fallthru
      _
    // Predicated region
    $region18: #{vae_forward.1} parent=1 // pred_check
      _
    $region19: #{vae_forward.1} parent=1 // pred_check_branch
      %48 = sbr.rel (0) target = $region21
    $region20: #{vae_forward.1} parent=1 // pred_region
      %49 = dma.done [#allocation3], 128
    $region21: #{vae_forward.1} parent=1 // pred_fallthru
      _
    // Predicated region
    $region22: #{vae_forward.1} parent=1 // pred_check
      _
    $region23: #{vae_forward.1} parent=1 // pred_check_branch
      %51 = sbr.rel (0) target = $region25
    $region24: #{vae_forward.1} parent=1 // pred_region
      %52 = dma.done [#allocation5], 3072
    $region25: #{vae_forward.1} parent=1 // pred_fallthru
      _
    // Predicated region
    $region26: #{vae_forward.1} parent=1 // pred_check
      _
    $region27: #{vae_forward.1} parent=1 // pred_check_branch
      %54 = sbr.rel (0) target = $region29
    $region28: #{vae_forward.1} parent=1 // pred_region
      %55 = dma.done [#allocation5], 96
    $region29: #{vae_forward.1} parent=1 // pred_fallthru
      _
    %v56 = vld [vmem:[#allocation2] sm:$0xff]
    %v57 = vld [vmem:[#allocation4] sm:$0xff]
    %v58 = vld [vmem:[#allocation4 + $0x8] sm:$0xff]
    %v59 = vld [vmem:[#allocation4 + $0x10] sm:$0xff]
    %v60 = vld [vmem:[#allocation4 + $0x18] sm:$0xff]
    %v61 = vld [vmem:[#allocation6] sm:$0x1]
    %v63 = vlaneseq
    %v64 = vshrl.u32 %v63, 7
    %v65 = vsub.s32 0, %v64
    %v66 = vrot.slane %v61, %v65
    %vm68 = vcmask 261120
    %v70 = vsel %vm68, %v56, 0
    %72 = vmatprep.subr.mxu0 0.0
    %73 = vmatpush1.msra.mxu0 %v57
    %74 = vmatprep.subr.mxu0 0.0
    %75 = vmatpush1.msra.mxu0 %v58
    %76 = vmatprep.subr.mxu0 0.0
    %77 = vmatpush1.msra.mxu0 %v59
    %78 = vmatprep.subr.mxu0 0.0
    %79 = vmatpush1.msra.mxu0 %v60
    %80 = vmatprep.subr.mxu0 0.0
    %81 = vmatpush1.msra.mxu0 0.0
    %82 = vmatprep.subr.mxu0 0.0
    %83 = vmatpush1.msra.mxu0 0.0
    %84 = vmatprep.subr.mxu0 0.0
    %85 = vmatpush1.msra.mxu0 0.0
    %86 = vmatprep.subr.mxu0 0.0
    %87 = vmatpush1.msra.mxu0 0.0
    %88 = vmatprep.subr.mxu0 0.0
    %89 = vmatpush1.msra.mxu0 0.0
    %90 = vmatprep.subr.mxu0 0.0
    %91 = vmatpush1.msra.mxu0 0.0
    %92 = vmatprep.subr.mxu0 0.0
    %93 = vmatpush1.msra.mxu0 0.0
    %94 = vmatprep.subr.mxu0 0.0
    %95 = vmatpush1.msra.mxu0 0.0
    %96 = vmatprep.subr.mxu0 0.0
    %97 = vmatpush1.msra.mxu0 0.0
    %98 = vmatprep.subr.mxu0 0.0
    %99 = vmatpush1.msra.mxu0 0.0
    %100 = vmatprep.subr.mxu0 0.0
    %101 = vmatpush1.msra.mxu0 0.0
    %102 = vmatprep.subr.mxu0 0.0
    %103 = vmatpush1.msra.mxu0 0.0
    %104 = vmatprep.subr.mxu0 0.0
    %105 = vmatpush1.msra.mxu0 0.0
    %106 = vmatprep.subr.mxu0 0.0
    %107 = vmatpush1.msra.mxu0 0.0
    %108 = vmatprep.subr.mxu0 0.0
    %109 = vmatpush1.msra.mxu0 0.0
    %110 = vmatprep.subr.mxu0 0.0
    %111 = vmatpush1.msra.mxu0 0.0
    %112 = vmatprep.subr.mxu0 0.0
    %113 = vmatpush1.msra.mxu0 0.0
    %114 = vmatprep.subr.mxu0 0.0
    %115 = vmatpush1.msra.mxu0 0.0
    %116 = vmatprep.subr.mxu0 0.0
    %117 = vmatpush1.msra.mxu0 0.0
    %118 = vmatprep.subr.mxu0 0.0
    %119 = vmatpush1.msra.mxu0 0.0
    %120 = vmatprep.subr.mxu0 0.0
    %121 = vmatpush1.msra.mxu0 0.0
    %122 = vmatprep.subr.mxu0 0.0
    %123 = vmatpush1.msra.mxu0 0.0
    %124 = vmatprep.subr.mxu0 0.0
    %125 = vmatpush1.msra.mxu0 0.0
    %126 = vmatprep.subr.mxu0 0.0
    %127 = vmatpush1.msra.mxu0 0.0
    %128 = vmatprep.subr.mxu0 0.0
    %129 = vmatpush1.msra.mxu0 0.0
    %130 = vmatprep.subr.mxu0 0.0
    %131 = vmatpush1.msra.mxu0 0.0
    %132 = vmatprep.subr.mxu0 0.0
    %133 = vmatpush1.msra.mxu0 0.0
    %134 = vmatprep.subr.mxu0 0.0
    %135 = vmatpush1.msra.mxu0 0.0
    %136 = vmatprep.mubr.f32.mxu0 0.0
    %137 = vmatmul.mubr.f32.gmra.mrb[0].mxu0 %v70
    %v138 = vpop.f32.mrb[0].mxu0
    %v139 = vadd.f32 %v66, %v138
    %v140 = vpop.f32.mrb[0].mxu0
    %141 = vdwg.mxu0
    %v142 = vmax.f32 %v139, 0.0
    %s143 = scalar_lea.vmem [#allocation4], 32
    %v144 = vld [vmem:[%s143] sm:$0xff]
    %v145 = vld [vmem:[%s143 + $0x8] sm:$0xff]
    %v146 = vld [vmem:[%s143 + $0x10] sm:$0xff]
    %v147 = vld [vmem:[%s143 + $0x18] sm:$0xff]
    %s148 = scalar_lea.vmem [#allocation6], 1
    %v149 = vld [vmem:[%s148] sm:$0x1]
    %v151 = vlaneseq
    %v152 = vshrl.u32 %v151, 7
    %v153 = vsub.s32 0, %v152
    %v154 = vrot.slane %v149, %v153
    %v157 = vsel %vm68, %v142, 0
    %159 = vmatprep.subr.mxu0 0.0
    %160 = vmatpush1.msra.mxu0 %v144
    %161 = vmatprep.subr.mxu0 0.0
    %162 = vmatpush1.msra.mxu0 %v145
    %163 = vmatprep.subr.mxu0 0.0
    %164 = vmatpush1.msra.mxu0 %v146
    %165 = vmatprep.subr.mxu0 0.0
    %166 = vmatpush1.msra.mxu0 %v147
    %167 = vmatprep.subr.mxu0 0.0
    %168 = vmatpush1.msra.mxu0 0.0
    %169 = vmatprep.subr.mxu0 0.0
    %170 = vmatpush1.msra.mxu0 0.0
    %171 = vmatprep.subr.mxu0 0.0
    %172 = vmatpush1.msra.mxu0 0.0
    %173 = vmatprep.subr.mxu0 0.0
    %174 = vmatpush1.msra.mxu0 0.0
    %175 = vmatprep.subr.mxu0 0.0
    %176 = vmatpush1.msra.mxu0 0.0
    %177 = vmatprep.subr.mxu0 0.0
    %178 = vmatpush1.msra.mxu0 0.0
    %179 = vmatprep.subr.mxu0 0.0
    %180 = vmatpush1.msra.mxu0 0.0
    %181 = vmatprep.subr.mxu0 0.0
    %182 = vmatpush1.msra.mxu0 0.0
    %183 = vmatprep.subr.mxu0 0.0
    %184 = vmatpush1.msra.mxu0 0.0
    %185 = vmatprep.subr.mxu0 0.0
    %186 = vmatpush1.msra.mxu0 0.0
    %187 = vmatprep.subr.mxu0 0.0
    %188 = vmatpush1.msra.mxu0 0.0
    %189 = vmatprep.subr.mxu0 0.0
    %190 = vmatpush1.msra.mxu0 0.0
    %191 = vmatprep.subr.mxu0 0.0
    %192 = vmatpush1.msra.mxu0 0.0
    %193 = vmatprep.subr.mxu0 0.0
    %194 = vmatpush1.msra.mxu0 0.0
    %195 = vmatprep.subr.mxu0 0.0
    %196 = vmatpush1.msra.mxu0 0.0
    %197 = vmatprep.subr.mxu0 0.0
    %198 = vmatpush1.msra.mxu0 0.0
    %199 = vmatprep.subr.mxu0 0.0
    %200 = vmatpush1.msra.mxu0 0.0
    %201 = vmatprep.subr.mxu0 0.0
    %202 = vmatpush1.msra.mxu0 0.0
    %203 = vmatprep.subr.mxu0 0.0
    %204 = vmatpush1.msra.mxu0 0.0
    %205 = vmatprep.subr.mxu0 0.0
    %206 = vmatpush1.msra.mxu0 0.0
    %207 = vmatprep.subr.mxu0 0.0
    %208 = vmatpush1.msra.mxu0 0.0
    %209 = vmatprep.subr.mxu0 0.0
    %210 = vmatpush1.msra.mxu0 0.0
    %211 = vmatprep.subr.mxu0 0.0
    %212 = vmatpush1.msra.mxu0 0.0
    %213 = vmatprep.subr.mxu0 0.0
    %214 = vmatpush1.msra.mxu0 0.0
    %215 = vmatprep.subr.mxu0 0.0
    %216 = vmatpush1.msra.mxu0 0.0
    %217 = vmatprep.subr.mxu0 0.0
    %218 = vmatpush1.msra.mxu0 0.0
    %219 = vmatprep.subr.mxu0 0.0
    %220 = vmatpush1.msra.mxu0 0.0
    %221 = vmatprep.subr.mxu0 0.0
    %222 = vmatpush1.msra.mxu0 0.0
    %223 = vmatprep.mubr.f32.mxu0 0.0
    %224 = vmatmul.mubr.f32.gmra.mrb[0].mxu0 %v157
    %v225 = vpop.f32.mrb[0].mxu0
    %v226 = vadd.f32 %v154, %v225
    %v227 = vpop.f32.mrb[0].mxu0
    %228 = vdwg.mxu0
    %v229 = vmax.f32 %v226, 0.0
    %s230 = scalar_lea.vmem [#allocation4], 64
    %v231 = vld [vmem:[%s230] sm:$0xff]
    %v232 = vld [vmem:[%s230 + $0x8] sm:$0xff]
    %v233 = vld [vmem:[%s230 + $0x10] sm:$0xff]
    %v234 = vld [vmem:[%s230 + $0x18] sm:$0xff]
    %s235 = scalar_lea.vmem [#allocation6], 2
    %v236 = vld [vmem:[%s235] sm:$0x1]
    %v238 = vlaneseq
    %v239 = vshrl.u32 %v238, 7
    %v240 = vsub.s32 0, %v239
    %v241 = vrot.slane %v236, %v240
    %v244 = vsel %vm68, %v229, 0
    %246 = vmatprep.subr.mxu0 0.0
    %247 = vmatpush1.msra.mxu0 %v231
    %248 = vmatprep.subr.mxu0 0.0
    %249 = vmatpush1.msra.mxu0 %v232
    %250 = vmatprep.subr.mxu0 0.0
    %251 = vmatpush1.msra.mxu0 %v233
    %252 = vmatprep.subr.mxu0 0.0
    %253 = vmatpush1.msra.mxu0 %v234
    %254 = vmatprep.subr.mxu0 0.0
    %255 = vmatpush1.msra.mxu0 0.0
    %256 = vmatprep.subr.mxu0 0.0
    %257 = vmatpush1.msra.mxu0 0.0
    %258 = vmatprep.subr.mxu0 0.0
    %259 = vmatpush1.msra.mxu0 0.0
    %260 = vmatprep.subr.mxu0 0.0
    %261 = vmatpush1.msra.mxu0 0.0
    %262 = vmatprep.subr.mxu0 0.0
    %263 = vmatpush1.msra.mxu0 0.0
    %264 = vmatprep.subr.mxu0 0.0
    %265 = vmatpush1.msra.mxu0 0.0
    %266 = vmatprep.subr.mxu0 0.0
    %267 = vmatpush1.msra.mxu0 0.0
    %268 = vmatprep.subr.mxu0 0.0
    %269 = vmatpush1.msra.mxu0 0.0
    %270 = vmatprep.subr.mxu0 0.0
    %271 = vmatpush1.msra.mxu0 0.0
    %272 = vmatprep.subr.mxu0 0.0
    %273 = vmatpush1.msra.mxu0 0.0
    %274 = vmatprep.subr.mxu0 0.0
    %275 = vmatpush1.msra.mxu0 0.0
    %276 = vmatprep.subr.mxu0 0.0
    %277 = vmatpush1.msra.mxu0 0.0
    %278 = vmatprep.subr.mxu0 0.0
    %279 = vmatpush1.msra.mxu0 0.0
    %280 = vmatprep.subr.mxu0 0.0
    %281 = vmatpush1.msra.mxu0 0.0
    %282 = vmatprep.subr.mxu0 0.0
    %283 = vmatpush1.msra.mxu0 0.0
    %284 = vmatprep.subr.mxu0 0.0
    %285 = vmatpush1.msra.mxu0 0.0
    %286 = vmatprep.subr.mxu0 0.0
    %287 = vmatpush1.msra.mxu0 0.0
    %288 = vmatprep.subr.mxu0 0.0
    %289 = vmatpush1.msra.mxu0 0.0
    %290 = vmatprep.subr.mxu0 0.0
    %291 = vmatpush1.msra.mxu0 0.0
    %292 = vmatprep.subr.mxu0 0.0
    %293 = vmatpush1.msra.mxu0 0.0
    %294 = vmatprep.subr.mxu0 0.0
    %295 = vmatpush1.msra.mxu0 0.0
    %296 = vmatprep.subr.mxu0 0.0
    %297 = vmatpush1.msra.mxu0 0.0
    %298 = vmatprep.subr.mxu0 0.0
    %299 = vmatpush1.msra.mxu0 0.0
    %300 = vmatprep.subr.mxu0 0.0
    %301 = vmatpush1.msra.mxu0 0.0
    %302 = vmatprep.subr.mxu0 0.0
    %303 = vmatpush1.msra.mxu0 0.0
    %304 = vmatprep.subr.mxu0 0.0
    %305 = vmatpush1.msra.mxu0 0.0
    %306 = vmatprep.subr.mxu0 0.0
    %307 = vmatpush1.msra.mxu0 0.0
    %308 = vmatprep.subr.mxu0 0.0
    %309 = vmatpush1.msra.mxu0 0.0
    %310 = vmatprep.mubr.f32.mxu0 0.0
    %311 = vmatmul.mubr.f32.gmra.mrb[0].mxu0 %v244
    %v312 = vpop.f32.mrb[0].mxu0
    %v313 = vadd.f32 %v241, %v312
    %v314 = vpop.f32.mrb[0].mxu0
    %315 = vdwg.mxu0
    %v316 = vld [vmem:[%s1] sm:$0xff]
    %v317 = vmul.f32 %v313, 0.5
    %v318 = vmul.f32 %v317, 1.442695
    %v319 = vpow.pop %v318
    %321 = vrot.lane.b32.xlu0 %v319, 120
    %v322 = vpop.permute.xlu0 %321
    %v324 = vmul.f32 %v316, %v322
    %v325 = vadd.f32 %v324, %v313
    %vm326 = vcmask 64512
    %v327 = vsel %vm326, %v325, 0.0
    %s328 = scalar_lea.vmem [#allocation4], 96
    %v329 = vld [vmem:[%s328] sm:$0xff]
    %v330 = vld [vmem:[%s328 + $0x8] sm:$0xff]
    %v331 = vld [vmem:[%s328 + $0x10] sm:$0xff]
    %v332 = vld [vmem:[%s328 + $0x18] sm:$0xff]
    %s333 = scalar_lea.vmem [#allocation6], 3
    %v334 = vld [vmem:[%s333] sm:$0x1]
    %v336 = vlaneseq
    %v337 = vshrl.u32 %v336, 7
    %v338 = vsub.s32 0, %v337
    %v339 = vrot.slane %v334, %v338
    %v342 = vsel %vm68, %v327, 0
    %344 = vmatprep.subr.mxu0 0.0
    %345 = vmatpush1.msra.mxu0 %v329
    %346 = vmatprep.subr.mxu0 0.0
    %347 = vmatpush1.msra.mxu0 %v330
    %348 = vmatprep.subr.mxu0 0.0
    %349 = vmatpush1.msra.mxu0 %v331
    %350 = vmatprep.subr.mxu0 0.0
    %351 = vmatpush1.msra.mxu0 %v332
    %352 = vmatprep.subr.mxu0 0.0
    %353 = vmatpush1.msra.mxu0 0.0
    %354 = vmatprep.subr.mxu0 0.0
    %355 = vmatpush1.msra.mxu0 0.0
    %356 = vmatprep.subr.mxu0 0.0
    %357 = vmatpush1.msra.mxu0 0.0
    %358 = vmatprep.subr.mxu0 0.0
    %359 = vmatpush1.msra.mxu0 0.0
    %360 = vmatprep.subr.mxu0 0.0
    %361 = vmatpush1.msra.mxu0 0.0
    %362 = vmatprep.subr.mxu0 0.0
    %363 = vmatpush1.msra.mxu0 0.0
    %364 = vmatprep.subr.mxu0 0.0
    %365 = vmatpush1.msra.mxu0 0.0
    %366 = vmatprep.subr.mxu0 0.0
    %367 = vmatpush1.msra.mxu0 0.0
    %368 = vmatprep.subr.mxu0 0.0
    %369 = vmatpush1.msra.mxu0 0.0
    %370 = vmatprep.subr.mxu0 0.0
    %371 = vmatpush1.msra.mxu0 0.0
    %372 = vmatprep.subr.mxu0 0.0
    %373 = vmatpush1.msra.mxu0 0.0
    %374 = vmatprep.subr.mxu0 0.0
    %375 = vmatpush1.msra.mxu0 0.0
    %376 = vmatprep.subr.mxu0 0.0
    %377 = vmatpush1.msra.mxu0 0.0
    %378 = vmatprep.subr.mxu0 0.0
    %379 = vmatpush1.msra.mxu0 0.0
    %380 = vmatprep.subr.mxu0 0.0
    %381 = vmatpush1.msra.mxu0 0.0
    %382 = vmatprep.subr.mxu0 0.0
    %383 = vmatpush1.msra.mxu0 0.0
    %384 = vmatprep.subr.mxu0 0.0
    %385 = vmatpush1.msra.mxu0 0.0
    %386 = vmatprep.subr.mxu0 0.0
    %387 = vmatpush1.msra.mxu0 0.0
    %388 = vmatprep.subr.mxu0 0.0
    %389 = vmatpush1.msra.mxu0 0.0
    %390 = vmatprep.subr.mxu0 0.0
    %391 = vmatpush1.msra.mxu0 0.0
    %392 = vmatprep.subr.mxu0 0.0
    %393 = vmatpush1.msra.mxu0 0.0
    %394 = vmatprep.subr.mxu0 0.0
    %395 = vmatpush1.msra.mxu0 0.0
    %396 = vmatprep.subr.mxu0 0.0
    %397 = vmatpush1.msra.mxu0 0.0
    %398 = vmatprep.subr.mxu0 0.0
    %399 = vmatpush1.msra.mxu0 0.0
    %400 = vmatprep.subr.mxu0 0.0
    %401 = vmatpush1.msra.mxu0 0.0
    %402 = vmatprep.subr.mxu0 0.0
    %403 = vmatpush1.msra.mxu0 0.0
    %404 = vmatprep.subr.mxu0 0.0
    %405 = vmatpush1.msra.mxu0 0.0
    %406 = vmatprep.subr.mxu0 0.0
    %407 = vmatpush1.msra.mxu0 0.0
    %408 = vmatprep.mubr.f32.mxu0 0.0
    %409 = vmatmul.mubr.f32.gmra.mrb[0].mxu0 %v342
    %v410 = vpop.f32.mrb[0].mxu0
    %v411 = vadd.f32 %v339, %v410
    %v412 = vpop.f32.mrb[0].mxu0
    %413 = vdwg.mxu0
    %v414 = vmax.f32 %v411, 0.0
    %s415 = scalar_lea.vmem [#allocation4], 128
    %v416 = vld [vmem:[%s415] sm:$0xff]
    %v417 = vld [vmem:[%s415 + $0x8] sm:$0xff]
    %v418 = vld [vmem:[%s415 + $0x10] sm:$0xff]
    %v419 = vld [vmem:[%s415 + $0x18] sm:$0xff]
    %s420 = scalar_lea.vmem [#allocation6], 4
    %v421 = vld [vmem:[%s420] sm:$0x1]
    %v423 = vlaneseq
    %v424 = vshrl.u32 %v423, 7
    %v425 = vsub.s32 0, %v424
    %v426 = vrot.slane %v421, %v425
    %v429 = vsel %vm68, %v414, 0
    %431 = vmatprep.subr.mxu0 0.0
    %432 = vmatpush1.msra.mxu0 %v416
    %433 = vmatprep.subr.mxu0 0.0
    %434 = vmatpush1.msra.mxu0 %v417
    %435 = vmatprep.subr.mxu0 0.0
    %436 = vmatpush1.msra.mxu0 %v418
    %437 = vmatprep.subr.mxu0 0.0
    %438 = vmatpush1.msra.mxu0 %v419
    %439 = vmatprep.subr.mxu0 0.0
    %440 = vmatpush1.msra.mxu0 0.0
    %441 = vmatprep.subr.mxu0 0.0
    %442 = vmatpush1.msra.mxu0 0.0
    %443 = vmatprep.subr.mxu0 0.0
    %444 = vmatpush1.msra.mxu0 0.0
    %445 = vmatprep.subr.mxu0 0.0
    %446 = vmatpush1.msra.mxu0 0.0
    %447 = vmatprep.subr.mxu0 0.0
    %448 = vmatpush1.msra.mxu0 0.0
    %449 = vmatprep.subr.mxu0 0.0
    %450 = vmatpush1.msra.mxu0 0.0
    %451 = vmatprep.subr.mxu0 0.0
    %452 = vmatpush1.msra.mxu0 0.0
    %453 = vmatprep.subr.mxu0 0.0
    %454 = vmatpush1.msra.mxu0 0.0
    %455 = vmatprep.subr.mxu0 0.0
    %456 = vmatpush1.msra.mxu0 0.0
    %457 = vmatprep.subr.mxu0 0.0
    %458 = vmatpush1.msra.mxu0 0.0
    %459 = vmatprep.subr.mxu0 0.0
    %460 = vmatpush1.msra.mxu0 0.0
    %461 = vmatprep.subr.mxu0 0.0
    %462 = vmatpush1.msra.mxu0 0.0
    %463 = vmatprep.subr.mxu0 0.0
    %464 = vmatpush1.msra.mxu0 0.0
    %465 = vmatprep.subr.mxu0 0.0
    %466 = vmatpush1.msra.mxu0 0.0
    %467 = vmatprep.subr.mxu0 0.0
    %468 = vmatpush1.msra.mxu0 0.0
    %469 = vmatprep.subr.mxu0 0.0
    %470 = vmatpush1.msra.mxu0 0.0
    %471 = vmatprep.subr.mxu0 0.0
    %472 = vmatpush1.msra.mxu0 0.0
    %473 = vmatprep.subr.mxu0 0.0
    %474 = vmatpush1.msra.mxu0 0.0
    %475 = vmatprep.subr.mxu0 0.0
    %476 = vmatpush1.msra.mxu0 0.0
    %477 = vmatprep.subr.mxu0 0.0
    %478 = vmatpush1.msra.mxu0 0.0
    %479 = vmatprep.subr.mxu0 0.0
    %480 = vmatpush1.msra.mxu0 0.0
    %481 = vmatprep.subr.mxu0 0.0
    %482 = vmatpush1.msra.mxu0 0.0
    %483 = vmatprep.subr.mxu0 0.0
    %484 = vmatpush1.msra.mxu0 0.0
    %485 = vmatprep.subr.mxu0 0.0
    %486 = vmatpush1.msra.mxu0 0.0
    %487 = vmatprep.subr.mxu0 0.0
    %488 = vmatpush1.msra.mxu0 0.0
    %489 = vmatprep.subr.mxu0 0.0
    %490 = vmatpush1.msra.mxu0 0.0
    %491 = vmatprep.subr.mxu0 0.0
    %492 = vmatpush1.msra.mxu0 0.0
    %493 = vmatprep.subr.mxu0 0.0
    %494 = vmatpush1.msra.mxu0 0.0
    %495 = vmatprep.mubr.f32.mxu0 0.0
    %496 = vmatmul.mubr.f32.gmra.mrb[0].mxu0 %v429
    %v497 = vpop.f32.mrb[0].mxu0
    %v498 = vadd.f32 %v426, %v497
    %v499 = vpop.f32.mrb[0].mxu0
    %500 = vdwg.mxu0
    %v501 = vmax.f32 %v498, 0.0
    %s502 = scalar_lea.vmem [#allocation4], 160
    %v503 = vld [vmem:[%s502] sm:$0xff]
    %v504 = vld [vmem:[%s502 + $0x8] sm:$0xff]
    %v505 = vld [vmem:[%s502 + $0x10] sm:$0xff]
    %v506 = vld [vmem:[%s502 + $0x18] sm:$0xff]
    %s507 = scalar_lea.vmem [#allocation6], 5
    %v508 = vld [vmem:[%s507] sm:$0x1]
    %v510 = vlaneseq
    %v511 = vshrl.u32 %v510, 7
    %v512 = vsub.s32 0, %v511
    %v513 = vrot.slane %v508, %v512
    %v516 = vsel %vm68, %v501, 0
    %518 = vmatprep.subr.mxu0 0.0
    %519 = vmatpush1.msra.mxu0 %v503
    %520 = vmatprep.subr.mxu0 0.0
    %521 = vmatpush1.msra.mxu0 %v504
    %522 = vmatprep.subr.mxu0 0.0
    %523 = vmatpush1.msra.mxu0 %v505
    %524 = vmatprep.subr.mxu0 0.0
    %525 = vmatpush1.msra.mxu0 %v506
    %526 = vmatprep.subr.mxu0 0.0
    %527 = vmatpush1.msra.mxu0 0.0
    %528 = vmatprep.subr.mxu0 0.0
    %529 = vmatpush1.msra.mxu0 0.0
    %530 = vmatprep.subr.mxu0 0.0
    %531 = vmatpush1.msra.mxu0 0.0
    %532 = vmatprep.subr.mxu0 0.0
    %533 = vmatpush1.msra.mxu0 0.0
    %534 = vmatprep.subr.mxu0 0.0
    %535 = vmatpush1.msra.mxu0 0.0
    %536 = vmatprep.subr.mxu0 0.0
    %537 = vmatpush1.msra.mxu0 0.0
    %538 = vmatprep.subr.mxu0 0.0
    %539 = vmatpush1.msra.mxu0 0.0
    %540 = vmatprep.subr.mxu0 0.0
    %541 = vmatpush1.msra.mxu0 0.0
    %542 = vmatprep.subr.mxu0 0.0
    %543 = vmatpush1.msra.mxu0 0.0
    %544 = vmatprep.subr.mxu0 0.0
    %545 = vmatpush1.msra.mxu0 0.0
    %546 = vmatprep.subr.mxu0 0.0
    %547 = vmatpush1.msra.mxu0 0.0
    %548 = vmatprep.subr.mxu0 0.0
    %549 = vmatpush1.msra.mxu0 0.0
    %550 = vmatprep.subr.mxu0 0.0
    %551 = vmatpush1.msra.mxu0 0.0
    %552 = vmatprep.subr.mxu0 0.0
    %553 = vmatpush1.msra.mxu0 0.0
    %554 = vmatprep.subr.mxu0 0.0
    %555 = vmatpush1.msra.mxu0 0.0
    %556 = vmatprep.subr.mxu0 0.0
    %557 = vmatpush1.msra.mxu0 0.0
    %558 = vmatprep.subr.mxu0 0.0
    %559 = vmatpush1.msra.mxu0 0.0
    %560 = vmatprep.subr.mxu0 0.0
    %561 = vmatpush1.msra.mxu0 0.0
    %562 = vmatprep.subr.mxu0 0.0
    %563 = vmatpush1.msra.mxu0 0.0
    %564 = vmatprep.subr.mxu0 0.0
    %565 = vmatpush1.msra.mxu0 0.0
    %566 = vmatprep.subr.mxu0 0.0
    %567 = vmatpush1.msra.mxu0 0.0
    %568 = vmatprep.subr.mxu0 0.0
    %569 = vmatpush1.msra.mxu0 0.0
    %570 = vmatprep.subr.mxu0 0.0
    %571 = vmatpush1.msra.mxu0 0.0
    %572 = vmatprep.subr.mxu0 0.0
    %573 = vmatpush1.msra.mxu0 0.0
    %574 = vmatprep.subr.mxu0 0.0
    %575 = vmatpush1.msra.mxu0 0.0
    %576 = vmatprep.subr.mxu0 0.0
    %577 = vmatpush1.msra.mxu0 0.0
    %578 = vmatprep.subr.mxu0 0.0
    %579 = vmatpush1.msra.mxu0 0.0
    %580 = vmatprep.subr.mxu0 0.0
    %581 = vmatpush1.msra.mxu0 0.0
    %582 = vmatprep.mubr.f32.mxu0 0.0
    %583 = vmatmul.mubr.f32.gmra.mrb[0].mxu0 %v516
    %v584 = vpop.f32.mrb[0].mxu0
    %v585 = vadd.f32 %v513, %v584
    %v586 = vpop.f32.mrb[0].mxu0
    %587 = vdwg.mxu0
    %v588 = vsub.f32 0.0, %v585
    %v589 = vmul.f32 %v588, 1.442695
    %v590 = vpow.pop %v589
    %v591 = vadd.f32 %v590, 1.0
    %v592 = vrcp.pop %v591
    %v593 = vmax.f32 %v592, 0.0
    %v594 = vmin.f32 %v593, 1.0
    %596 = vrot.lane.b32.xlu0 %v313, 32
    %v597 = vpop.permute.xlu0 %596
    %600 = vrot.lane.b32.xlu0 %v325, 48
    %v601 = vpop.permute.xlu0 %600
    %v603 = vsel %vm68, %v594, %v597
    %vm604 = vcmask 326656
    %v605 = vsel %vm604, %v603, %v597
    %vm606 = vcmask 392192
    %v607 = vsel %vm606, %v605, %v601
    %vm608 = vcmask 457728
    %v609 = vsel %vm608, %v607, 0.0
    %610 = vst [vmem:[%s4] sm:$0xff] %v609
    // Predicated region
    $region30: #{vae_forward.1} parent=1 // pred_check
      _
    $region31: #{vae_forward.1} parent=1 // pred_check_branch
      %612 = sbr.rel (0) target = $region33
    $region32: #{vae_forward.1} parent=1 // pred_region
      _
    $region33: #{vae_forward.1} parent=1 // pred_fallthru
      _
    // Predicated region
    $region34: #{vae_forward.1} parent=1 // pred_check
      _
    $region35: #{vae_forward.1} parent=1 // pred_check_branch
      %614 = sbr.rel (0) target = $region37
    $region36: #{vae_forward.1} parent=1 // pred_region
      _
    $region37: #{vae_forward.1} parent=1 // pred_fallthru
      _
    %615 = vsyncpa [#allocation3], 1
    %616 = vsyncpa [#allocation5], 1

</llo_original>
